<compile_context>
chip_gen: v6e
topology: v6e:2x2x1
jax: 0.10.0
libtpu: 0.0.40
codegen_flags: <defaults>
</compile_context>

<pallas_src>
import functools

import jax
import jax.numpy as jnp
from jax import lax
from jax.experimental import pallas as pl
from jax.experimental.pallas import tpu as pltpu

LANE = 128      # channel axis padded to multiples of this (lane-dense)
SUBLANE = 8     # L tiles are multiples of this (sublane alignment)


def _round_up(x, m):
    return (x + m - 1) // m * m


# ------------------------------ Pallas kernel ------------------------------ #

def _temporal_block_kernel(*refs, k, d, has_down, carry):
    """Fused TemporalBlock on one (batch row, L tile) with VMEM halo carry."""
    it = iter(refs)
    x_ref = next(it)                                  # (1, TL, Cin)
    w1_ref = next(it)                                 # (k, Cin, Cout)
    b1_ref = next(it)                                 # (1, Cout) f32
    w2_ref = next(it)                                 # (k, Cout, Cout)
    b2_ref = next(it)                                 # (1, Cout) f32
    wd_ref = next(it) if has_down else None           # (1, Cin, Cout)
    bd_ref = next(it) if has_down else None           # (1, Cout) f32
    o_ref = next(it)                                  # (1, TL, Cout)
    xh_ref = next(it) if carry else None              # (h1, Cin)  carried raw-x halo
    hh_ref = next(it) if carry else None              # (h1, Cout) carried conv1-out halo

    TL, Cin = x_ref.shape[1], x_ref.shape[2]
    Cout = o_ref.shape[2]
    h1 = (k - 1) * d                                   # causal context of one conv
    f32 = jnp.float32

    if carry:
        # Reset the carried halos at the start of every batch row's L sweep.
        @pl.when(pl.program_id(1) == 0)
        def _():
            xh_ref[...] = jnp.zeros_like(xh_ref)
            hh_ref[...] = jnp.zeros_like(hh_ref)

    x_cur = x_ref[0]                                   # (TL, Cin)

    # ---- conv1 (dilated, causal) + relu: per-tap accumulated MXU matmuls ----
    # Tap k-1 reads exactly the current tile -> no copy.
    acc = jnp.dot(x_cur, w1_ref[k - 1], preferred_element_type=f32)
    if h1 > 0:
        x_halo = xh_ref[...] if carry else jnp.zeros((h1, Cin), x_cur.dtype)
        x_win = jnp.concatenate([x_halo, x_cur], axis=0)          # (h1+TL, Cin)
        for j in range(k - 1):
            acc = acc + jnp.dot(x_win[j * d: j * d + TL, :], w1_ref[j],
                                preferred_element_type=f32)
    h = jnp.maximum(acc + b1_ref[...], 0.0)
    # TODO(synk): dropout1 = identity (inference)
    h_c = h.astype(x_cur.dtype)

    # ---- conv2 (dilated, causal) + relu ----
    acc2 = jnp.dot(h_c, w2_ref[k - 1], preferred_element_type=f32)
    if h1 > 0:
        h_halo = hh_ref[...] if carry else jnp.zeros((h1, Cout), h_c.dtype)
        h_win = jnp.concatenate([h_halo, h_c], axis=0)            # (h1+TL, Cout)
        for j in range(k - 1):
            acc2 = acc2 + jnp.dot(h_win[j * d: j * d + TL, :], w2_ref[j],
                                  preferred_element_type=f32)
    out = jnp.maximum(acc2 + b2_ref[...], 0.0)
    # TODO(synk): dropout2 = identity (inference)

    # ---- residual: identity or fused 1x1 downsample ----
    if has_down:
        res = jnp.dot(x_cur, wd_ref[0], preferred_element_type=f32) + bd_ref[...]
    else:
        res = x_cur.astype(f32)

    y = jnp.maximum(out + res, 0.0)
    o_ref[0] = y.astype(o_ref.dtype)

    # ---- update the carried halos for the next L tile ----
    if carry:
        xh_ref[...] = x_cur[TL - h1:, :]
        hh_ref[...] = h_c[TL - h1:, :]


# ------------------------------ JAX wrappers ------------------------------- #

def _vmem_limit_bytes():
    try:
        cap = int(pltpu.get_tpu_info().vmem_capacity_bytes)
    except Exception:
        cap = 128 << 20
    # ~96 MiB on v5e/v6e (128 MiB chips), ~48 MiB on v7x (64 MiB chip).
    return cap * 3 // 4


def _choose_tl(L, cmax, compute_dtype, h1_max, vmem_limit, max_tl=None):
    """Largest L tile (multiple of 8, >= max causal halo) fitting the VMEM budget."""
    bpe = jnp.dtype(compute_dtype).itemsize
    # Per-L-row bytes: double-buffered in/out blocks + f32 intermediates
    # (accumulators, residual, y) + compute-dtype copies (windows, conv1 out).
    per_row = 2 * 2 * cmax * bpe + 6 * cmax * 4 + 3 * cmax * bpe
    budget = max(int(vmem_limit * 0.6) - (4 << 20), 4 << 20)  # weights headroom
    tl_cap = max(SUBLANE, min(budget // per_row, 4096))
    tl_cap = tl_cap // SUBLANE * SUBLANE
    if max_tl is not None:
        tl_cap = max(SUBLANE, min(tl_cap, _round_up(max_tl, SUBLANE)))
    tl_min = _round_up(max(h1_max, SUBLANE), SUBLANE)
    if tl_cap >= L:
        return max(_round_up(L, SUBLANE), SUBLANE)
    nl = -(-L // tl_cap)
    tl = _round_up(-(-L // nl), SUBLANE)        # balance tile sizes across L
    return max(tl, tl_min)


def temporal_block(x_blc, layer, *, tl):
    """Fused TemporalBlock: conv1+relu -> conv2+relu -> (+1x1) -> add -> relu."""
    B, lp, cin = x_blc.shape
    w1 = layer["w1"]
    k, _, cout = w1.shape
    d = layer["dilation"]
    nl = lp // tl
    h1 = (k - 1) * d
    carry = (h1 > 0) and (nl > 1)
    if carry:
        assert tl >= h1, f"L tile ({tl}) must cover the causal halo ({h1})"
    has_down = layer["wd"] is not None

    kern = functools.partial(_temporal_block_kernel, k=k, d=d,
                             has_down=has_down, carry=carry)

    def full_spec(a):
        nd = a.ndim
        return pl.BlockSpec(a.shape, lambda b, i, _nd=nd: (0,) * _nd)

    in_specs = [pl.BlockSpec((1, tl, cin), lambda b, i: (b, i, 0)),
                full_spec(w1), full_spec(layer["b1"]),
                full_spec(layer["w2"]), full_spec(layer["b2"])]
    args = [x_blc, w1, layer["b1"], layer["w2"], layer["b2"]]
    if has_down:
        in_specs += [full_spec(layer["wd"]), full_spec(layer["bd"])]
        args += [layer["wd"], layer["bd"]]

    scratch_shapes = []
    if carry:
        scratch_shapes = [pltpu.VMEM((h1, cin), x_blc.dtype),
                          pltpu.VMEM((h1, cout), x_blc.dtype)]

    return pl.pallas_call(
        kern,
        grid=(B, nl),
        in_specs=in_specs,
        out_specs=pl.BlockSpec((1, tl, cout), lambda b, i: (b, i, 0)),
        out_shape=jax.ShapeDtypeStruct((B, lp, cout), x_blc.dtype),
        scratch_shapes=scratch_shapes,
        compiler_params=pltpu.CompilerParams(
            # B parallel (megacore on v7x); L arbitrary (sequential halo carry).
            dimension_semantics=("parallel", "arbitrary"),
            vmem_limit_bytes=_vmem_limit_bytes()),
    )(*args)


def prepare_params(params, compute_dtype):
    """Zero-pad channel dims to LANE multiples, cast weights to compute dtype."""
    def pad_axis(a, axis, new):
        pads = [(0, 0)] * a.ndim
        pads[axis] = (0, new - a.shape[axis])
        return jnp.pad(a, pads)

    prepped = []
    for p in params:
        _, cin, cout = p["w1"].shape
        cinp, coutp = _round_up(cin, LANE), _round_up(cout, LANE)
        w1 = pad_axis(pad_axis(p["w1"], 1, cinp), 2, coutp).astype(compute_dtype)
        w2 = pad_axis(pad_axis(p["w2"], 1, coutp), 2, coutp).astype(compute_dtype)
        b1 = pad_axis(p["b1"], 0, coutp).reshape(1, coutp).astype(jnp.float32)
        b2 = pad_axis(p["b2"], 0, coutp).reshape(1, coutp).astype(jnp.float32)
        if p["wd"] is not None:
            wd = pad_axis(pad_axis(p["wd"], 1, cinp), 2, coutp).astype(compute_dtype)
            bd = pad_axis(p["bd"], 0, coutp).reshape(1, coutp).astype(jnp.float32)
        else:
            wd = bd = None
        prepped.append(dict(w1=w1, b1=b1, w2=w2, b2=b2, wd=wd, bd=bd,
                            dilation=p["dilation"], cout=cout))
    return prepped


def temporal_conv_net(x_ncl, params, *, compute_dtype=jnp.bfloat16, max_tl=None):
    """Forward pass. Input/output in PyTorch NCL layout (B, C, L)."""
    B, c0, L = x_ncl.shape
    k = params[0]["w1"].shape[0]
    h1_max = max((k - 1) * p["dilation"] for p in params)

    prepped = prepare_params(params, compute_dtype)
    cmax = max(max(p["w1"].shape[1], p["w1"].shape[2]) for p in prepped)

    tl = _choose_tl(L, cmax, compute_dtype, h1_max, _vmem_limit_bytes(), max_tl)
    lp = _round_up(L, tl)

    # One-time layout prep: channels-last, pad L tail + channels to lanes.
    # (Tail L padding never contaminates t < L because the convs are causal;
    #  padded channel lanes stay exactly zero through every layer.)
    c0p = _round_up(c0, LANE)
    x = jnp.transpose(x_ncl, (0, 2, 1)).astype(compute_dtype)      # (B, L, C)
    x = jnp.pad(x, ((0, 0), (0, lp - L), (0, c0p - c0)))

    for layer in prepped:
        x = temporal_block(x, layer, tl=tl)

    out = x[:, :L, :prepped[-1]["cout"]]
    return jnp.transpose(out, (0, 2, 1))                           # (B, C, L)


# --------------------------- Parameter construction ------------------------- #

def init_tcn_params(key, num_inputs, num_channels, kernel_size):
    """Deterministic synthetic init matching the module's shapes.

    Conv weights stored as (k, Cin, Cout) == transpose of PyTorch (Cout, Cin, k).
    """
    params = []
    for i, cout in enumerate(num_channels):
        cin = num_inputs if i == 0 else num_channels[i - 1]
        dilation = 2 ** i
        key, kw1, kw2, kwd, kb1, kb2, kbd = jax.random.split(key, 7)
        w1 = 0.01 * jax.random.normal(kw1, (kernel_size, cin, cout), jnp.float32)
        b1 = 0.01 * jax.random.normal(kb1, (cout,), jnp.float32)
        w2 = 0.01 * jax.random.normal(kw2, (kernel_size, cout, cout), jnp.float32)
        b2 = 0.01 * jax.random.normal(kb2, (cout,), jnp.float32)
        if cin != cout:
            wd = 0.01 * jax.random.normal(kwd, (1, cin, cout), jnp.float32)
            bd = 0.01 * jax.random.normal(kbd, (cout,), jnp.float32)
        else:
            wd, bd = None, None
        params.append(dict(w1=w1, b1=b1, w2=w2, b2=b2, wd=wd, bd=bd,
                           dilation=dilation))
    return params


# ------------------------------ Pure-JAX reference -------------------------- #

def _ref_conv(x_ncl, w_kio, bias, dilation):
    k, _, cout = w_kio.shape
    pad = (k - 1) * dilation
    w_oik = jnp.transpose(w_kio, (2, 1, 0))
    y = lax.conv_general_dilated(
        x_ncl, w_oik, window_strides=(1,), padding=[(pad, pad)],
        rhs_dilation=(dilation,), dimension_numbers=("NCH", "OIH", "NCH"))
    if pad > 0:
        y = y[:, :, :x_ncl.shape[2]]                          # Chomp1d
    return y + bias[None, :, None]


def temporal_conv_net_ref(x_ncl, params):
    x = x_ncl
    for p in params:
        h = jax.nn.relu(_ref_conv(x, p["w1"], p["b1"], p["dilation"]))
        h = jax.nn.relu(_ref_conv(h, p["w2"], p["b2"], p["dilation"]))
        res = x if p["wd"] is None else _ref_conv(x, p["wd"], p["bd"], 1)
        x = jax.nn.relu(h + res)
    return x


# ----------------------------------- main ----------------------------------- #

if __name__ == "__main__":
    key = jax.random.PRNGKey(0)
    kernel_size = 2

    # --- Config A: tiny shapes, single L tile, 1x1 downsample in both layers.
    B, num_inputs, L = 2, 4, 16
    num_channels = (8, 16)
    key, kx, kp = jax.random.split(key, 3)
    x = jax.random.normal(kx, (B, num_inputs, L), jnp.float32)    # NCL (PyTorch)
    params = init_tcn_params(kp, num_inputs, num_channels, kernel_size)

    out = jax.block_until_ready(
        temporal_conv_net(x, params, compute_dtype=jnp.float32))
    ref = jax.block_until_ready(temporal_conv_net_ref(x, params))
    assert out.shape == (B, num_channels[-1], L)
    assert jnp.allclose(out, ref, atol=1e-5, rtol=1e-5), "config A f32 mismatch"

    # bf16 operands / f32 accumulate (default production path).
    out_bf16 = jax.block_until_ready(temporal_conv_net(x, params))
    assert jnp.allclose(out_bf16.astype(jnp.float32), ref,
                        atol=3e-2, rtol=3e-2), "config A bf16 mismatch"

    # --- Config B: multiple L tiles (exercises the VMEM halo-carry path),
    # non-multiple L (tail padding), identity residual, dilations 1/2/4.
    B2, ni2, L2 = 2, 4, 50
    ch2 = (8, 8, 16)
    key, kx2, kp2 = jax.random.split(key, 3)
    x2 = jax.random.normal(kx2, (B2, ni2, L2), jnp.float32)
    params2 = init_tcn_params(kp2, ni2, ch2, kernel_size)
    out2 = jax.block_until_ready(
        temporal_conv_net(x2, params2, compute_dtype=jnp.float32, max_tl=16))
    ref2 = jax.block_until_ready(temporal_conv_net_ref(x2, params2))
    assert out2.shape == (B2, ch2[-1], L2)
    assert jnp.allclose(out2, ref2, atol=1e-5, rtol=1e-5), "config B f32 mismatch"

    print("KERNEL_OK")
</pallas_src>

<mosaic_0001>
module attributes {stable_mosaic.version = 11 : i64} {
  func.func @_temporal_block_kernel(%arg0: i32, %arg1: i32, %arg2: memref<1x16x128xf32, #tpu.memory_space<vmem>>, %arg3: memref<2x128x128xf32, #tpu.memory_space<vmem>>, %arg4: memref<1x128xf32, #tpu.memory_space<vmem>>, %arg5: memref<2x128x128xf32, #tpu.memory_space<vmem>>, %arg6: memref<1x128xf32, #tpu.memory_space<vmem>>, %arg7: memref<1x128x128xf32, #tpu.memory_space<vmem>>, %arg8: memref<1x128xf32, #tpu.memory_space<vmem>>, %arg9: memref<1x16x128xf32, #tpu.memory_space<vmem>>) attributes {dimension_semantics = [#tpu.dimension_semantics<parallel>, #tpu.dimension_semantics<arbitrary>], iteration_bounds = array<i64: 2, 1>, scalar_prefetch = 0 : i64, scratch_operands = 0 : i64, tpu.core_type = #tpu.core_type<tc>, window_params = [{transform_indices = @transform_0, window_bounds = array<i64: 1, 16, 128>}, {pipeline_mode = #tpu.pipeline_mode<synchronous>, transform_indices = @transform_1, window_bounds = array<i64: 2, 128, 128>}, {pipeline_mode = #tpu.pipeline_mode<synchronous>, transform_indices = @transform_2, window_bounds = array<i64: 1, 128>}, {pipeline_mode = #tpu.pipeline_mode<synchronous>, transform_indices = @transform_3, window_bounds = array<i64: 2, 128, 128>}, {pipeline_mode = #tpu.pipeline_mode<synchronous>, transform_indices = @transform_4, window_bounds = array<i64: 1, 128>}, {pipeline_mode = #tpu.pipeline_mode<synchronous>, transform_indices = @transform_5, window_bounds = array<i64: 1, 128, 128>}, {pipeline_mode = #tpu.pipeline_mode<synchronous>, transform_indices = @transform_6, window_bounds = array<i64: 1, 128>}, {transform_indices = @transform_7, window_bounds = array<i64: 1, 16, 128>}]} {
    %c0 = arith.constant 0 : index
    %c0_0 = arith.constant 0 : index
    %c0_1 = arith.constant 0 : index
    %0 = vector.load %arg2[%c0, %c0_0, %c0_1] : memref<1x16x128xf32, #tpu.memory_space<vmem>>, vector<1x16x128xf32>
    %1 = vector.shape_cast %0 : vector<1x16x128xf32> to vector<16x128xf32>
    %c1 = arith.constant 1 : index
    %c0_2 = arith.constant 0 : index
    %c0_3 = arith.constant 0 : index
    %2 = vector.load %arg3[%c1, %c0_2, %c0_3] : memref<2x128x128xf32, #tpu.memory_space<vmem>>, vector<1x128x128xf32>
    %3 = vector.shape_cast %2 : vector<1x128x128xf32> to vector<128x128xf32>
    %cst = arith.constant dense<0.000000e+00> : vector<16x128xf32>
    %4 = tpu.matmul %1, %3, %cst {dimension_numbers = #tpu.dot_dimension_numbers<[1], [0], [0], [1], [0, 0, 1, 1], [], []>} : vector<16x128xf32>, vector<128x128xf32>, vector<16x128xf32> -> vector<16x128xf32>
    %cst_4 = arith.constant 0.000000e+00 : f32
    %5 = vector.broadcast %cst_4 : f32 to vector<1x128xf32>
    %6 = tpu.concatenate %5, %1 in 0 : vector<1x128xf32>, vector<16x128xf32> -> vector<17x128xf32>
    %7 = vector.extract_strided_slice %6 {offsets = [0, 0], sizes = [16, 128], strides = [1, 1]} : vector<17x128xf32> to vector<16x128xf32>
    %c0_5 = arith.constant 0 : index
    %c0_6 = arith.constant 0 : index
    %c0_7 = arith.constant 0 : index
    %8 = vector.load %arg3[%c0_5, %c0_6, %c0_7] : memref<2x128x128xf32, #tpu.memory_space<vmem>>, vector<1x128x128xf32>
    %9 = vector.shape_cast %8 : vector<1x128x128xf32> to vector<128x128xf32>
    %cst_8 = arith.constant dense<0.000000e+00> : vector<16x128xf32>
    %10 = tpu.matmul %7, %9, %cst_8 {dimension_numbers = #tpu.dot_dimension_numbers<[1], [0], [0], [1], [0, 0, 1, 1], [], []>} : vector<16x128xf32>, vector<128x128xf32>, vector<16x128xf32> -> vector<16x128xf32>
    %11 = arith.addf %4, %10 : vector<16x128xf32>
    %c0_9 = arith.constant 0 : index
    %c0_10 = arith.constant 0 : index
    %12 = vector.load %arg4[%c0_9, %c0_10] : memref<1x128xf32, #tpu.memory_space<vmem>>, vector<1x128xf32>
    %13 = vector.broadcast %12 : vector<1x128xf32> to vector<16x128xf32>
    %14 = arith.addf %11, %13 : vector<16x128xf32>
    %cst_11 = arith.constant 0.000000e+00 : f32
    %15 = vector.broadcast %cst_11 : f32 to vector<16x128xf32>
    %16 = arith.maximumf %14, %15 : vector<16x128xf32>
    %c1_12 = arith.constant 1 : index
    %c0_13 = arith.constant 0 : index
    %c0_14 = arith.constant 0 : index
    %17 = vector.load %arg5[%c1_12, %c0_13, %c0_14] : memref<2x128x128xf32, #tpu.memory_space<vmem>>, vector<1x128x128xf32>
    %18 = vector.shape_cast %17 : vector<1x128x128xf32> to vector<128x128xf32>
    %cst_15 = arith.constant dense<0.000000e+00> : vector<16x128xf32>
    %19 = tpu.matmul %16, %18, %cst_15 {dimension_numbers = #tpu.dot_dimension_numbers<[1], [0], [0], [1], [0, 0, 1, 1], [], []>} : vector<16x128xf32>, vector<128x128xf32>, vector<16x128xf32> -> vector<16x128xf32>
    %cst_16 = arith.constant 0.000000e+00 : f32
    %20 = vector.broadcast %cst_16 : f32 to vector<1x128xf32>
    %21 = tpu.concatenate %20, %16 in 0 : vector<1x128xf32>, vector<16x128xf32> -> vector<17x128xf32>
    %22 = vector.extract_strided_slice %21 {offsets = [0, 0], sizes = [16, 128], strides = [1, 1]} : vector<17x128xf32> to vector<16x128xf32>
    %c0_17 = arith.constant 0 : index
    %c0_18 = arith.constant 0 : index
    %c0_19 = arith.constant 0 : index
    %23 = vector.load %arg5[%c0_17, %c0_18, %c0_19] : memref<2x128x128xf32, #tpu.memory_space<vmem>>, vector<1x128x128xf32>
    %24 = vector.shape_cast %23 : vector<1x128x128xf32> to vector<128x128xf32>
    %cst_20 = arith.constant dense<0.000000e+00> : vector<16x128xf32>
    %25 = tpu.matmul %22, %24, %cst_20 {dimension_numbers = #tpu.dot_dimension_numbers<[1], [0], [0], [1], [0, 0, 1, 1], [], []>} : vector<16x128xf32>, vector<128x128xf32>, vector<16x128xf32> -> vector<16x128xf32>
    %26 = arith.addf %19, %25 : vector<16x128xf32>
    %c0_21 = arith.constant 0 : index
    %c0_22 = arith.constant 0 : index
    %27 = vector.load %arg6[%c0_21, %c0_22] : memref<1x128xf32, #tpu.memory_space<vmem>>, vector<1x128xf32>
    %28 = vector.broadcast %27 : vector<1x128xf32> to vector<16x128xf32>
    %29 = arith.addf %26, %28 : vector<16x128xf32>
    %cst_23 = arith.constant 0.000000e+00 : f32
    %30 = vector.broadcast %cst_23 : f32 to vector<16x128xf32>
    %31 = arith.maximumf %29, %30 : vector<16x128xf32>
    %c0_24 = arith.constant 0 : index
    %c0_25 = arith.constant 0 : index
    %c0_26 = arith.constant 0 : index
    %32 = vector.load %arg7[%c0_24, %c0_25, %c0_26] : memref<1x128x128xf32, #tpu.memory_space<vmem>>, vector<1x128x128xf32>
    %33 = vector.shape_cast %32 : vector<1x128x128xf32> to vector<128x128xf32>
    %cst_27 = arith.constant dense<0.000000e+00> : vector<16x128xf32>
    %34 = tpu.matmul %1, %33, %cst_27 {dimension_numbers = #tpu.dot_dimension_numbers<[1], [0], [0], [1], [0, 0, 1, 1], [], []>} : vector<16x128xf32>, vector<128x128xf32>, vector<16x128xf32> -> vector<16x128xf32>
    %c0_28 = arith.constant 0 : index
    %c0_29 = arith.constant 0 : index
    %35 = vector.load %arg8[%c0_28, %c0_29] : memref<1x128xf32, #tpu.memory_space<vmem>>, vector<1x128xf32>
    %36 = vector.broadcast %35 : vector<1x128xf32> to vector<16x128xf32>
    %37 = arith.addf %34, %36 : vector<16x128xf32>
    %38 = arith.addf %31, %37 : vector<16x128xf32>
    %cst_30 = arith.constant 0.000000e+00 : f32
    %39 = vector.broadcast %cst_30 : f32 to vector<16x128xf32>
    %40 = arith.maximumf %38, %39 : vector<16x128xf32>
    %c0_31 = arith.constant 0 : index
    %c0_32 = arith.constant 0 : index
    %c0_33 = arith.constant 0 : index
    %41 = vector.load %arg9[%c0_31, %c0_32, %c0_33] : memref<1x16x128xf32, #tpu.memory_space<vmem>>, vector<1x16x128xf32>
    %42 = vector.shape_cast %41 : vector<1x16x128xf32> to vector<16x128xf32>
    %43 = vector.shape_cast %40 : vector<16x128xf32> to vector<1x16x128xf32>
    tpu.vector_store %arg9[%c0_31, %c0_32, %c0_33], %43 {strides = array<i32>} : memref<1x16x128xf32, #tpu.memory_space<vmem>>, vector<1x16x128xf32>,
    return
  }
  func.func @transform_0(%arg0: i32, %arg1: i32) -> (i32, i32, i32) {
    %c0_i32 = arith.constant 0 : i32
    %c0_i32_0 = arith.constant 0 : i32
    return %arg0, %arg1, %c0_i32 : i32, i32, i32
  }
  func.func @transform_1(%arg0: i32, %arg1: i32) -> (i32, i32, i32) {
    %c0_i32 = arith.constant 0 : i32
    %c0_i32_0 = arith.constant 0 : i32
    %c0_i32_1 = arith.constant 0 : i32
    %c0_i32_2 = arith.constant 0 : i32
    return %c0_i32, %c0_i32_0, %c0_i32_1 : i32, i32, i32
  }
  func.func @transform_2(%arg0: i32, %arg1: i32) -> (i32, i32) {
    %c0_i32 = arith.constant 0 : i32
    %c0_i32_0 = arith.constant 0 : i32
    %c0_i32_1 = arith.constant 0 : i32
    return %c0_i32, %c0_i32_0 : i32, i32
  }
  func.func @transform_3(%arg0: i32, %arg1: i32) -> (i32, i32, i32) {
    %c0_i32 = arith.constant 0 : i32
    %c0_i32_0 = arith.constant 0 : i32
    %c0_i32_1 = arith.constant 0 : i32
    %c0_i32_2 = arith.constant 0 : i32
    return %c0_i32, %c0_i32_0, %c0_i32_1 : i32, i32, i32
  }
  func.func @transform_4(%arg0: i32, %arg1: i32) -> (i32, i32) {
    %c0_i32 = arith.constant 0 : i32
    %c0_i32_0 = arith.constant 0 : i32
    %c0_i32_1 = arith.constant 0 : i32
    return %c0_i32, %c0_i32_0 : i32, i32
  }
  func.func @transform_5(%arg0: i32, %arg1: i32) -> (i32, i32, i32) {
    %c0_i32 = arith.constant 0 : i32
    %c0_i32_0 = arith.constant 0 : i32
    %c0_i32_1 = arith.constant 0 : i32
    %c0_i32_2 = arith.constant 0 : i32
    return %c0_i32, %c0_i32_0, %c0_i32_1 : i32, i32, i32
  }
  func.func @transform_6(%arg0: i32, %arg1: i32) -> (i32, i32) {
    %c0_i32 = arith.constant 0 : i32
    %c0_i32_0 = arith.constant 0 : i32
    %c0_i32_1 = arith.constant 0 : i32
    return %c0_i32, %c0_i32_0 : i32, i32
  }
  func.func @transform_7(%arg0: i32, %arg1: i32) -> (i32, i32, i32) {
    %c0_i32 = arith.constant 0 : i32
    %c0_i32_0 = arith.constant 0 : i32
    return %arg0, %arg1, %c0_i32 : i32, i32, i32
  }
}

</mosaic_0001>

<llo_original>
// kernel: tpu_custom_call.1
$region0: #{tpu_custom_call.1}
  #allocation0 [shape = 'u32[]', space=smem, size = 0x4, offset = 0x4, fixed_abs, tag = 'smem constant byte address 0x4 - core index']
  #allocation1 [shape = 'u32[144,128]{1,0:T(1,128)}', space=vmem, size = 0x12000, scoped, tag = 'internal scratch']
  %s0 = inlined_call_operand.hbm [shape: f32[2,16,128], index: 0, kind: input, shape index: {}]
  %s1 = inlined_call_operand.hbm [shape: f32[2,128,128], index: 1, kind: input, shape index: {}]
  %s2 = inlined_call_operand.vmem [shape: f32[1,128], index: 2, kind: input, shape index: {}]
  %s3 = inlined_call_operand.hbm [shape: f32[2,128,128], index: 3, kind: input, shape index: {}]
  %s4 = inlined_call_operand.vmem [shape: f32[1,128], index: 4, kind: input, shape index: {}]
  %s5 = inlined_call_operand.hbm [shape: f32[1,128,128], index: 5, kind: input, shape index: {}]
  %s6 = inlined_call_operand.vmem [shape: f32[1,128], index: 6, kind: input, shape index: {}]
  %s7 = inlined_call_operand.hbm [shape: f32[2,16,128], index: 7, kind: output, shape index: {}]
  %s8 = sld [smem:[#allocation0]]
  $region77: #{tpu_custom_call.1} parent=0
    _
  %s10 = ssub.s32 1, %s8
  %s11 = scalar_select 0, %s10, %s8
  $region1: #{tpu_custom_call.1} parent=0
    #allocation2 [shape = 'u8[16384]{0}', space=vmem, size = 0x4000, scoped, tag = 'input window, operand 0']
    #allocation3 [shape = 's32[2]{0}', space=sflag, size = 0x8, scoped, tag = 'scoped memory for tpu_custom_call.1']
    #allocation4 [shape = 's32[2]{0}', space=sflag, size = 0x8, scoped, tag = 'scoped memory for tpu_custom_call.1']
    #allocation5 [shape = 'u8[131072]{0}', space=vmem, size = 0x20000, scoped, tag = 'input window, operand 1, single buffered']
    #allocation6 [shape = 's32[1]{0}', space=sflag, size = 0x4, scoped, tag = 'scoped memory for tpu_custom_call.1']
    #allocation7 [shape = 'u8[131072]{0}', space=vmem, size = 0x20000, scoped, tag = 'input window, operand 3, single buffered']
    #allocation8 [shape = 'u8[65536]{0}', space=vmem, size = 0x10000, scoped, tag = 'input window, operand 5, single buffered']
    #allocation9 [shape = 's32[1]{0}', space=sflag, size = 0x4, scoped, tag = 'scoped memory for tpu_custom_call.1']
    #allocation10 [shape = 'u8[16384]{0}', space=vmem, size = 0x4000, scoped, tag = 'output window, operand 0']
    %12 = vsyncpa [#allocation3], 0
    %s13 = scalar_lea.sflag [#allocation3], 1
    %14 = vsyncpa %s13, 0
    %15 = vsyncpa [#allocation6], 0
    %16 = vsyncpa [#allocation9], 0
    %17 = vsyncpa [#allocation4], 0
    %s18 = scalar_lea.sflag [#allocation4], 1
    %19 = vsyncpa %s18, 0
    loop: start=0, step=1, limit=4
    $region2: #{tpu_custom_call.1} parent=1 // loop_pre_header
      _
    $region3: #{tpu_custom_call.1} parent=1 // loop_header
      %s21 = sphi 0, %s25
      %p22 = scmp.ge.s32.totalorder %s21, 4
      %s28 = sphi 0, %s40
      %s29 = sphi 0, %s36
      %s30 = sphi 0, %s28
      %s31 = sphi 0, %s29
      %s32 = sphi 0, %s30
      %s33 = sphi 0, %s31
      %s45 = sphi 0, %s47
      %s48 = sphi 0, %s45
      %s49 = sphi 0, %s48
      %s65 = sphi 0, %s49
      %s69 = sphi 0, %s69
      %s71 = sphi 0, %s69
      %s72 = sphi 0, %s71
      %s86 = sphi 0, %s72
      %s90 = sphi 0, %s90
      %s92 = sphi 0, %s90
      %s93 = sphi 0, %s92
      %s107 = sphi 0, %s93
      %s111 = sphi 0, %s111
      %s113 = sphi 0, %s111
      %s114 = sphi 0, %s113
      %s128 = sphi 0, %s114
      %s132 = sphi 0, %s132
      %s134 = sphi 0, %s132
      %s135 = sphi 0, %s134
      %s149 = sphi 0, %s135
      %s153 = sphi 0, %s153
      %s155 = sphi 0, %s153
      %s156 = sphi 0, %s155
      %s170 = sphi 0, %s156
      %s174 = sphi 0, %s174
      %s176 = sphi 0, %s174
      %s177 = sphi 0, %s176
      %s191 = sphi 0, %s177
      %s199 = sphi 0, %s201
      %s202 = sphi 0, %s199
      %s203 = sphi 0, %s202
      %s219 = sphi 0, %s203
    $region4: #{tpu_custom_call.1} parent=1 // loop_header_branch
      %24 = sbr.rel (%p22) target = $region8
    $region5: #{tpu_custom_call.1} parent=1 // loop_body
      %s26 = ssub.s32 %s21, 1
      %s27 = ssub.s32 %s21, 2
      %s34 = sadd.s32 1, %s29
      %p35 = scmp.ge.s32.totalorder %s34, 1
      %s36 = scalar_select %p35, 0, %s34
      %s37 = sadd.s32 1, %s28
      %s38 = scalar_select %p35, %s37, %s28
      %p39 = scmp.ge.s32.totalorder %s38, 2
      %s40 = scalar_select %p39, 0, %s38
      %s41 = ssub.s32 %s28, %s40
      %s42 = ssub.s32 %s29, %s36
      %s43 = sor.u32 %s41, %s42
      %p44 = scmp.eq.s32.totalorder %s43, 0
      %s46 = sadd.s32 %s45, 1
      %s47 = scalar_select %p44, %s45, %s46
      %p50 = pneg %p44
      %p51 = scmp.eq.s32.totalorder %s21, 1
      %p52 = por %p50, %p51
      %p53 = scmp.ne.s32.totalorder %s45, %s48
      %p54 = scmp.eq.s32.totalorder %s21, 0
      %p55 = por %p53, %p54
      %p56 = scmp.ne.s32.totalorder %s45, %s48
      %p57 = scmp.eq.s32.totalorder %s26, 1
      %p58 = por %p56, %p57
      %p59 = scmp.ne.s32.totalorder %s48, %s49
      %p60 = scmp.eq.s32.totalorder %s26, 0
      %p61 = por %p59, %p60
      %p62 = scmp.ne.s32.totalorder %s48, %s49
      %p63 = scmp.eq.s32.totalorder %s27, 1
      %p64 = por %p62, %p63
      %p66 = scmp.ne.s32.totalorder %s49, %s65
      %p67 = scmp.eq.s32.totalorder %s27, 0
      %p68 = por %p66, %p67
      %s70 = sadd.s32 %s69, 1
      %p73 = scmp.eq.s32.totalorder %s21, 1
      %p74 = scmp.ne.s32.totalorder %s69, %s71
      %p75 = scmp.eq.s32.totalorder %s21, 0
      %p76 = por %p74, %p75
      %p77 = scmp.ne.s32.totalorder %s69, %s71
      %p78 = scmp.eq.s32.totalorder %s26, 1
      %p79 = por %p77, %p78
      %p80 = scmp.ne.s32.totalorder %s71, %s72
      %p81 = scmp.eq.s32.totalorder %s26, 0
      %p82 = por %p80, %p81
      %p83 = scmp.ne.s32.totalorder %s71, %s72
      %p84 = scmp.eq.s32.totalorder %s27, 1
      %p85 = por %p83, %p84
      %p87 = scmp.ne.s32.totalorder %s72, %s86
      %p88 = scmp.eq.s32.totalorder %s27, 0
      %p89 = por %p87, %p88
      %s91 = sadd.s32 %s90, 1
      %p94 = scmp.eq.s32.totalorder %s21, 1
      %p95 = scmp.ne.s32.totalorder %s90, %s92
      %p96 = scmp.eq.s32.totalorder %s21, 0
      %p97 = por %p95, %p96
      %p98 = scmp.ne.s32.totalorder %s90, %s92
      %p99 = scmp.eq.s32.totalorder %s26, 1
      %p100 = por %p98, %p99
      %p101 = scmp.ne.s32.totalorder %s92, %s93
      %p102 = scmp.eq.s32.totalorder %s26, 0
      %p103 = por %p101, %p102
      %p104 = scmp.ne.s32.totalorder %s92, %s93
      %p105 = scmp.eq.s32.totalorder %s27, 1
      %p106 = por %p104, %p105
      %p108 = scmp.ne.s32.totalorder %s93, %s107
      %p109 = scmp.eq.s32.totalorder %s27, 0
      %p110 = por %p108, %p109
      %s112 = sadd.s32 %s111, 1
      %p115 = scmp.eq.s32.totalorder %s21, 1
      %p116 = scmp.ne.s32.totalorder %s111, %s113
      %p117 = scmp.eq.s32.totalorder %s21, 0
      %p118 = por %p116, %p117
      %p119 = scmp.ne.s32.totalorder %s111, %s113
      %p120 = scmp.eq.s32.totalorder %s26, 1
      %p121 = por %p119, %p120
      %p122 = scmp.ne.s32.totalorder %s113, %s114
      %p123 = scmp.eq.s32.totalorder %s26, 0
      %p124 = por %p122, %p123
      %p125 = scmp.ne.s32.totalorder %s113, %s114
      %p126 = scmp.eq.s32.totalorder %s27, 1
      %p127 = por %p125, %p126
      %p129 = scmp.ne.s32.totalorder %s114, %s128
      %p130 = scmp.eq.s32.totalorder %s27, 0
      %p131 = por %p129, %p130
      %s133 = sadd.s32 %s132, 1
      %p136 = scmp.eq.s32.totalorder %s21, 1
      %p137 = scmp.ne.s32.totalorder %s132, %s134
      %p138 = scmp.eq.s32.totalorder %s21, 0
      %p139 = por %p137, %p138
      %p140 = scmp.ne.s32.totalorder %s132, %s134
      %p141 = scmp.eq.s32.totalorder %s26, 1
      %p142 = por %p140, %p141
      %p143 = scmp.ne.s32.totalorder %s134, %s135
      %p144 = scmp.eq.s32.totalorder %s26, 0
      %p145 = por %p143, %p144
      %p146 = scmp.ne.s32.totalorder %s134, %s135
      %p147 = scmp.eq.s32.totalorder %s27, 1
      %p148 = por %p146, %p147
      %p150 = scmp.ne.s32.totalorder %s135, %s149
      %p151 = scmp.eq.s32.totalorder %s27, 0
      %p152 = por %p150, %p151
      %s154 = sadd.s32 %s153, 1
      %p157 = scmp.eq.s32.totalorder %s21, 1
      %p158 = scmp.ne.s32.totalorder %s153, %s155
      %p159 = scmp.eq.s32.totalorder %s21, 0
      %p160 = por %p158, %p159
      %p161 = scmp.ne.s32.totalorder %s153, %s155
      %p162 = scmp.eq.s32.totalorder %s26, 1
      %p163 = por %p161, %p162
      %p164 = scmp.ne.s32.totalorder %s155, %s156
      %p165 = scmp.eq.s32.totalorder %s26, 0
      %p166 = por %p164, %p165
      %p167 = scmp.ne.s32.totalorder %s155, %s156
      %p168 = scmp.eq.s32.totalorder %s27, 1
      %p169 = por %p167, %p168
      %p171 = scmp.ne.s32.totalorder %s156, %s170
      %p172 = scmp.eq.s32.totalorder %s27, 0
      %p173 = por %p171, %p172
      %s175 = sadd.s32 %s174, 1
      %p178 = scmp.eq.s32.totalorder %s21, 1
      %p179 = scmp.ne.s32.totalorder %s174, %s176
      %p180 = scmp.eq.s32.totalorder %s21, 0
      %p181 = por %p179, %p180
      %p182 = scmp.ne.s32.totalorder %s174, %s176
      %p183 = scmp.eq.s32.totalorder %s26, 1
      %p184 = por %p182, %p183
      %p185 = scmp.ne.s32.totalorder %s176, %s177
      %p186 = scmp.eq.s32.totalorder %s26, 0
      %p187 = por %p185, %p186
      %p188 = scmp.ne.s32.totalorder %s176, %s177
      %p189 = scmp.eq.s32.totalorder %s27, 1
      %p190 = por %p188, %p189
      %p192 = scmp.ne.s32.totalorder %s177, %s191
      %p193 = scmp.eq.s32.totalorder %s27, 0
      %p194 = por %p192, %p193
      %s195 = ssub.s32 %s28, %s40
      %s196 = ssub.s32 %s29, %s36
      %s197 = sor.u32 %s195, %s196
      %p198 = scmp.eq.s32.totalorder %s197, 0
      %s200 = sadd.s32 %s199, 1
      %s201 = scalar_select %p198, %s199, %s200
      %p204 = pneg %p198
      %p205 = scmp.eq.s32.totalorder %s21, 1
      %p206 = por %p204, %p205
      %p207 = scmp.ne.s32.totalorder %s199, %s202
      %p208 = scmp.eq.s32.totalorder %s21, 0
      %p209 = por %p207, %p208
      %p210 = scmp.ne.s32.totalorder %s199, %s202
      %p211 = scmp.eq.s32.totalorder %s26, 1
      %p212 = por %p210, %p211
      %p213 = scmp.ne.s32.totalorder %s202, %s203
      %p214 = scmp.eq.s32.totalorder %s26, 0
      %p215 = por %p213, %p214
      %p216 = scmp.ne.s32.totalorder %s202, %s203
      %p217 = scmp.eq.s32.totalorder %s27, 1
      %p218 = por %p216, %p217
      %p220 = scmp.ne.s32.totalorder %s203, %s219
      %p221 = scmp.eq.s32.totalorder %s27, 0
      %p222 = por %p220, %p221
      %p223 = scmp.le.s32.totalorder 1, %s21
      %p224 = scmp.lt.s32.totalorder %s21, 3
      %p225 = pnand %p223, %p224
      %p226 = pneg %p225
      // Predicated region
      $region9: #{tpu_custom_call.1} parent=5 // pred_check
        _
      $region10: #{tpu_custom_call.1} parent=5 // pred_check_branch
        %228 = sbr.rel (%p225) target = $region12
      $region11: #{tpu_custom_call.1} parent=5 // pred_region
        %s229 = ssub.s32 %s21, 1
        // Predicated region
        $region13: #{tpu_custom_call.1} parent=11 // pred_check
          %p230 = pneg %p82
        $region14: #{tpu_custom_call.1} parent=11 // pred_check_branch
          %232 = sbr.rel (%p230) target = $region16
        $region15: #{tpu_custom_call.1} parent=11 // pred_region
          %s234 = ssub.s32 4096, 4096
          %235 = vsyncadd [#allocation6], %s234
          %s236 = sshll.u32 [#allocation5], 4
          %s237 = int_to_ptr.vmem [resolvable:$true] %s236
          %242 = dma.hbm_to_vmem [thread:$0]  %s1, 4096, %s237, [#allocation6], 128, 128, 8
        $region16: #{tpu_custom_call.1} parent=11 // pred_fallthru
          _
        // Predicated region
        $region17: #{tpu_custom_call.1} parent=11 // pred_check
          %p243 = pneg %p103
        $region18: #{tpu_custom_call.1} parent=11 // pred_check_branch
          %245 = sbr.rel (%p243) target = $region20
        $region19: #{tpu_custom_call.1} parent=11 // pred_region
          _
        $region20: #{tpu_custom_call.1} parent=11 // pred_fallthru
          _
        // Predicated region
        $region21: #{tpu_custom_call.1} parent=11 // pred_check
          %p246 = pneg %p124
        $region22: #{tpu_custom_call.1} parent=11 // pred_check_branch
          %248 = sbr.rel (%p246) target = $region24
        $region23: #{tpu_custom_call.1} parent=11 // pred_region
          %s250 = ssub.s32 4096, 4096
          %251 = vsyncadd [#allocation6], %s250
          %s252 = sshll.u32 [#allocation7], 4
          %s253 = int_to_ptr.vmem [resolvable:$true] %s252
          %258 = dma.hbm_to_vmem [thread:$0]  %s3, 4096, %s253, [#allocation6], 128, 128, 8
        $region24: #{tpu_custom_call.1} parent=11 // pred_fallthru
          _
        // Predicated region
        $region25: #{tpu_custom_call.1} parent=11 // pred_check
          %p259 = pneg %p145
        $region26: #{tpu_custom_call.1} parent=11 // pred_check_branch
          %261 = sbr.rel (%p259) target = $region28
        $region27: #{tpu_custom_call.1} parent=11 // pred_region
          _
        $region28: #{tpu_custom_call.1} parent=11 // pred_fallthru
          _
        // Predicated region
        $region29: #{tpu_custom_call.1} parent=11 // pred_check
          %p262 = pneg %p166
        $region30: #{tpu_custom_call.1} parent=11 // pred_check_branch
          %264 = sbr.rel (%p262) target = $region32
        $region31: #{tpu_custom_call.1} parent=11 // pred_region
          %s266 = ssub.s32 2048, 2048
          %267 = vsyncadd [#allocation9], %s266
          %s268 = sshll.u32 [#allocation8], 4
          %s269 = int_to_ptr.vmem [resolvable:$true] %s268
          %274 = dma.hbm_to_vmem [thread:$0]  %s5, 2048, %s269, [#allocation9], 128, 128, 8
        $region32: #{tpu_custom_call.1} parent=11 // pred_fallthru
          _
        // Predicated region
        $region33: #{tpu_custom_call.1} parent=11 // pred_check
          %p275 = pneg %p187
        $region34: #{tpu_custom_call.1} parent=11 // pred_check_branch
          %277 = sbr.rel (%p275) target = $region36
        $region35: #{tpu_custom_call.1} parent=11 // pred_region
          _
        $region36: #{tpu_custom_call.1} parent=11 // pred_fallthru
          _
      $region12: #{tpu_custom_call.1} parent=5 // pred_fallthru
        _
      %p278 = scmp.lt.s32.totalorder %s21, 2
      // Predicated region
      $region37: #{tpu_custom_call.1} parent=5 // pred_check
        %p279 = pneg %p278
      $region38: #{tpu_custom_call.1} parent=5 // pred_check_branch
        %281 = sbr.rel (%p279) target = $region40
      $region39: #{tpu_custom_call.1} parent=5 // pred_region
        // Predicated region
        $region41: #{tpu_custom_call.1} parent=39 // pred_check
          %p282 = pneg %p55
        $region42: #{tpu_custom_call.1} parent=39 // pred_check_branch
          %284 = sbr.rel (%p282) target = $region44
        $region43: #{tpu_custom_call.1} parent=39 // pred_region
          %s285 = sand.u32 %s45, 1
          %s286 = scalar_lea.sflag [#allocation3], %s285
          %s287 = sand.u32 %s45, 1
          %s288 = smul.addr %s287, 16
          %s289 = scalar_lea.vmem [#allocation2], %s288
          %s290 = smul.u32 2, %s29
          %s292 = ssub.s32 256, 256
          %293 = vsyncadd %s286, %s292
          %s294 = smul.addr %s28, 2
          %s295 = sadd.s32 %s290, %s294
          %s296 = smul.addr %s295, 128
          %s297 = scalar_lea.hbm %s0, %s296
          %s298 = sshll.u32 %s289, 4
          %s299 = int_to_ptr.vmem [resolvable:$true] %s298
          %304 = dma.hbm_to_vmem [thread:$0]  %s297, 256, %s299, %s286, 128, 128, 8
        $region44: #{tpu_custom_call.1} parent=39 // pred_fallthru
          _
      $region40: #{tpu_custom_call.1} parent=5 // pred_fallthru
        _
      %p305 = scmp.le.s32.totalorder 1, %s21
      %p306 = scmp.lt.s32.totalorder %s21, 3
      %p307 = pnand %p305, %p306
      %p308 = pneg %p307
      // Predicated region
      $region45: #{tpu_custom_call.1} parent=5 // pred_check
        _
      $region46: #{tpu_custom_call.1} parent=5 // pred_check_branch
        %310 = sbr.rel (%p307) target = $region48
      $region47: #{tpu_custom_call.1} parent=5 // pred_region
        %s311 = ssub.s32 %s21, 1
        %s312 = sand.u32 %s48, 1
        %s313 = scalar_lea.sflag [#allocation3], %s312
        %s314 = sand.u32 %s48, 1
        %s315 = smul.addr %s314, 16
        %s316 = scalar_lea.vmem [#allocation2], %s315
        // Predicated region
        $region49: #{tpu_custom_call.1} parent=47 // pred_check
          %p317 = pneg %p61
        $region50: #{tpu_custom_call.1} parent=47 // pred_check_branch
          %319 = sbr.rel (%p317) target = $region52
        $region51: #{tpu_custom_call.1} parent=47 // pred_region
          %320 = dma.done %s313, 256
        $region52: #{tpu_custom_call.1} parent=47 // pred_fallthru
          _
        // Predicated region
        $region53: #{tpu_custom_call.1} parent=47 // pred_check
          %p321 = pneg %p82
        $region54: #{tpu_custom_call.1} parent=47 // pred_check_branch
          %323 = sbr.rel (%p321) target = $region56
        $region55: #{tpu_custom_call.1} parent=47 // pred_region
          %324 = dma.done [#allocation6], 4096
        $region56: #{tpu_custom_call.1} parent=47 // pred_fallthru
          _
        // Predicated region
        $region57: #{tpu_custom_call.1} parent=47 // pred_check
          %p325 = pneg %p124
        $region58: #{tpu_custom_call.1} parent=47 // pred_check_branch
          %327 = sbr.rel (%p325) target = $region60
        $region59: #{tpu_custom_call.1} parent=47 // pred_region
          %328 = dma.done [#allocation6], 4096
        $region60: #{tpu_custom_call.1} parent=47 // pred_fallthru
          _
        // Predicated region
        $region61: #{tpu_custom_call.1} parent=47 // pred_check
          %p329 = pneg %p166
        $region62: #{tpu_custom_call.1} parent=47 // pred_check_branch
          %331 = sbr.rel (%p329) target = $region64
        $region63: #{tpu_custom_call.1} parent=47 // pred_region
          %332 = dma.done [#allocation9], 2048
        $region64: #{tpu_custom_call.1} parent=47 // pred_fallthru
          _
        %s333 = sand.u32 %s48, 1
        %s334 = scalar_lea.sflag [#allocation3], %s333
        %s335 = sand.u32 %s48, 1
        %s336 = smul.addr %s335, 16
        %s337 = scalar_lea.vmem [#allocation2], %s336
        %p338 = pneg %p61
        %p339 = pneg %p58
        %p340 = pneg %p82
        %p341 = pneg %p79
        %p342 = pneg %p103
        %p343 = pneg %p100
        %p344 = pneg %p124
        %p345 = pneg %p121
        %p346 = pneg %p145
        %p347 = pneg %p142
        %p348 = pneg %p166
        %p349 = pneg %p163
        %p350 = pneg %p187
        %p351 = pneg %p184
        %p352 = pneg %p215
        %p353 = pneg %p212
        %s354 = sand.u32 %s202, 1
        %s355 = scalar_lea.sflag [#allocation4], %s354
        %s356 = sand.u32 %s202, 1
        %s357 = smul.addr %s356, 16
        %s358 = scalar_lea.vmem [#allocation10], %s357
        %s359 = smul.u32 2, %s31
        %s360 = smul.u32 2, %s31
        %v361 = vld [vmem:[%s316] sm:$0xff]
        %v362 = vld [vmem:[%s316 + $0x8] sm:$0xff]
        %s363 = scalar_lea.vmem [#allocation5], 128
        %v364 = vld [vmem:[%s363] sm:$0xff]
        %v365 = vld [vmem:[%s363 + $0x8] sm:$0xff]
        %v366 = vld [vmem:[%s363 + $0x10] sm:$0xff]
        %v367 = vld [vmem:[%s363 + $0x18] sm:$0xff]
        %v368 = vld [vmem:[%s363 + $0x20] sm:$0xff]
        %v369 = vld [vmem:[%s363 + $0x28] sm:$0xff]
        %v370 = vld [vmem:[%s363 + $0x30] sm:$0xff]
        %v371 = vld [vmem:[%s363 + $0x38] sm:$0xff]
        %v372 = vld [vmem:[%s363 + $0x40] sm:$0xff]
        %v373 = vld [vmem:[%s363 + $0x48] sm:$0xff]
        %v374 = vld [vmem:[%s363 + $0x50] sm:$0xff]
        %v375 = vld [vmem:[%s363 + $0x58] sm:$0xff]
        %v376 = vld [vmem:[%s363 + $0x60] sm:$0xff]
        %v377 = vld [vmem:[%s363 + $0x68] sm:$0xff]
        %v378 = vld [vmem:[%s363 + $0x70] sm:$0xff]
        %v379 = vld [vmem:[%s363 + $0x78] sm:$0xff]
        %vm382 = vcmask 1040384
        %v383 = vrot.slane %v361, 7
        %v384 = vrot.slane %v362, 7
        %v385 = vsel %vm382, %v383, %v384
        %v388 = vsel %vm382, 0.0, %v383
        %v389 = vld [vmem:[#allocation5] sm:$0xff]
        %v390 = vld [vmem:[#allocation5 + $0x8] sm:$0xff]
        %v391 = vld [vmem:[#allocation5 + $0x10] sm:$0xff]
        %v392 = vld [vmem:[#allocation5 + $0x18] sm:$0xff]
        %v393 = vld [vmem:[#allocation5 + $0x20] sm:$0xff]
        %v394 = vld [vmem:[#allocation5 + $0x28] sm:$0xff]
        %v395 = vld [vmem:[#allocation5 + $0x30] sm:$0xff]
        %v396 = vld [vmem:[#allocation5 + $0x38] sm:$0xff]
        %v397 = vld [vmem:[#allocation5 + $0x40] sm:$0xff]
        %v398 = vld [vmem:[#allocation5 + $0x48] sm:$0xff]
        %v399 = vld [vmem:[#allocation5 + $0x50] sm:$0xff]
        %v400 = vld [vmem:[#allocation5 + $0x58] sm:$0xff]
        %v401 = vld [vmem:[#allocation5 + $0x60] sm:$0xff]
        %v402 = vld [vmem:[#allocation5 + $0x68] sm:$0xff]
        %v403 = vld [vmem:[#allocation5 + $0x70] sm:$0xff]
        %v404 = vld [vmem:[#allocation5 + $0x78] sm:$0xff]
        %405 = vmatprep.subr.mxu0 0.0
        %406 = vmatpush1.msra.mxu0 %v404
        %407 = vmatprep.subr.mxu0 0.0
        %408 = vmatpush1.msra.mxu0 %v403
        %409 = vmatprep.subr.mxu0 0.0
        %410 = vmatpush1.msra.mxu0 %v402
        %411 = vmatprep.subr.mxu0 0.0
        %412 = vmatpush1.msra.mxu0 %v401
        %413 = vmatprep.subr.mxu0 0.0
        %414 = vmatpush1.msra.mxu0 %v400
        %415 = vmatprep.subr.mxu0 0.0
        %416 = vmatpush1.msra.mxu0 %v399
        %417 = vmatprep.subr.mxu0 0.0
        %418 = vmatpush1.msra.mxu0 %v398
        %419 = vmatprep.subr.mxu0 0.0
        %420 = vmatpush1.msra.mxu0 %v397
        %421 = vmatprep.subr.mxu0 0.0
        %422 = vmatpush1.msra.mxu0 %v396
        %423 = vmatprep.subr.mxu0 0.0
        %424 = vmatpush1.msra.mxu0 %v395
        %425 = vmatprep.subr.mxu0 0.0
        %426 = vmatpush1.msra.mxu0 %v394
        %427 = vmatprep.subr.mxu0 0.0
        %428 = vmatpush1.msra.mxu0 %v393
        %429 = vmatprep.subr.mxu0 0.0
        %430 = vmatpush1.msra.mxu0 %v392
        %431 = vmatprep.subr.mxu0 0.0
        %432 = vmatpush1.msra.mxu0 %v391
        %433 = vmatprep.subr.mxu0 0.0
        %434 = vmatpush1.msra.mxu0 %v390
        %435 = vmatprep.subr.mxu0 0.0
        %436 = vmatpush1.msra.mxu0 %v389
        %437 = vmatprep.subr.mxu0 0.0
        %438 = vmatpush2.msra.mxu0 0.0
        %439 = vmatprep.subr.mxu0 0.0
        %440 = vmatpush2.msra.mxu0 0.0
        %441 = vmatprep.subr.mxu0 0.0
        %442 = vmatpush2.msra.mxu0 0.0
        %443 = vmatprep.subr.mxu0 0.0
        %444 = vmatpush2.msra.mxu0 0.0
        %445 = vmatprep.subr.mxu0 0.0
        %446 = vmatpush2.msra.mxu0 0.0
        %447 = vmatprep.subr.mxu0 0.0
        %448 = vmatpush2.msra.mxu0 0.0
        %449 = vmatprep.subr.mxu0 0.0
        %450 = vmatpush2.msra.mxu0 0.0
        %451 = vmatprep.subr.mxu0 0.0
        %452 = vmatpush2.msra.mxu0 0.0
        %453 = vmatprep.subr.mxu0 0.0
        %454 = vmatpush2.msra.mxu0 0.0
        %455 = vmatprep.subr.mxu0 0.0
        %456 = vmatpush2.msra.mxu0 0.0
        %457 = vmatprep.subr.mxu0 0.0
        %458 = vmatpush2.msra.mxu0 0.0
        %459 = vmatprep.subr.mxu0 0.0
        %460 = vmatpush2.msra.mxu0 0.0
        %461 = vmatprep.subr.mxu0 0.0
        %462 = vmatpush2.msra.mxu0 0.0
        %463 = vmatprep.subr.mxu0 0.0
        %464 = vmatpush2.msra.mxu0 0.0
        %465 = vmatprep.subr.mxu0 0.0
        %466 = vmatpush2.msra.mxu0 0.0
        %467 = vmatprep.subr.mxu0 0.0
        %468 = vmatpush2.msra.mxu0 0.0
        %469 = vmatprep.mubr.f32.mxu0 0.0
        %470 = vmatmul.mubr.f32.gmra.mxu0 %v388
        %v471 = vpop.f32.mrf.mxu0
        %v472 = vadd.f32 0.0, %v471
        %v473 = vpop.f32.mrf.mxu0
        %474 = vmatprep.mubr.f32.mxu0 0.0
        %475 = vmatmul.mubr.f32.gmra.mxu0 %v385
        %v476 = vpop.f32.mrf.mxu0
        %v477 = vadd.f32 0.0, %v476
        %v478 = vpop.f32.mrf.mxu0
        %479 = vdwg.mxu0
        %480 = vmatprep.subr.mxu0 0.0
        %481 = vmatpush1.msra.mxu0 %v379
        %482 = vmatprep.subr.mxu0 0.0
        %483 = vmatpush1.msra.mxu0 %v378
        %484 = vmatprep.subr.mxu0 0.0
        %485 = vmatpush1.msra.mxu0 %v377
        %486 = vmatprep.subr.mxu0 0.0
        %487 = vmatpush1.msra.mxu0 %v376
        %488 = vmatprep.subr.mxu0 0.0
        %489 = vmatpush1.msra.mxu0 %v375
        %490 = vmatprep.subr.mxu0 0.0
        %491 = vmatpush1.msra.mxu0 %v374
        %492 = vmatprep.subr.mxu0 0.0
        %493 = vmatpush1.msra.mxu0 %v373
        %494 = vmatprep.subr.mxu0 0.0
        %495 = vmatpush1.msra.mxu0 %v372
        %496 = vmatprep.subr.mxu0 0.0
        %497 = vmatpush1.msra.mxu0 %v371
        %498 = vmatprep.subr.mxu0 0.0
        %499 = vmatpush1.msra.mxu0 %v370
        %500 = vmatprep.subr.mxu0 0.0
        %501 = vmatpush1.msra.mxu0 %v369
        %502 = vmatprep.subr.mxu0 0.0
        %503 = vmatpush1.msra.mxu0 %v368
        %504 = vmatprep.subr.mxu0 0.0
        %505 = vmatpush1.msra.mxu0 %v367
        %506 = vmatprep.subr.mxu0 0.0
        %507 = vmatpush1.msra.mxu0 %v366
        %508 = vmatprep.subr.mxu0 0.0
        %509 = vmatpush1.msra.mxu0 %v365
        %510 = vmatprep.subr.mxu0 0.0
        %511 = vmatpush1.msra.mxu0 %v364
        %512 = vmatprep.subr.mxu0 0.0
        %513 = vmatpush2.msra.mxu0 0.0
        %514 = vmatprep.subr.mxu0 0.0
        %515 = vmatpush2.msra.mxu0 0.0
        %516 = vmatprep.subr.mxu0 0.0
        %517 = vmatpush2.msra.mxu0 0.0
        %518 = vmatprep.subr.mxu0 0.0
        %519 = vmatpush2.msra.mxu0 0.0
        %520 = vmatprep.subr.mxu0 0.0
        %521 = vmatpush2.msra.mxu0 0.0
        %522 = vmatprep.subr.mxu0 0.0
        %523 = vmatpush2.msra.mxu0 0.0
        %524 = vmatprep.subr.mxu0 0.0
        %525 = vmatpush2.msra.mxu0 0.0
        %526 = vmatprep.subr.mxu0 0.0
        %527 = vmatpush2.msra.mxu0 0.0
        %528 = vmatprep.subr.mxu0 0.0
        %529 = vmatpush2.msra.mxu0 0.0
        %530 = vmatprep.subr.mxu0 0.0
        %531 = vmatpush2.msra.mxu0 0.0
        %532 = vmatprep.subr.mxu0 0.0
        %533 = vmatpush2.msra.mxu0 0.0
        %534 = vmatprep.subr.mxu0 0.0
        %535 = vmatpush2.msra.mxu0 0.0
        %536 = vmatprep.subr.mxu0 0.0
        %537 = vmatpush2.msra.mxu0 0.0
        %538 = vmatprep.subr.mxu0 0.0
        %539 = vmatpush2.msra.mxu0 0.0
        %540 = vmatprep.subr.mxu0 0.0
        %541 = vmatpush2.msra.mxu0 0.0
        %542 = vmatprep.subr.mxu0 0.0
        %543 = vmatpush2.msra.mxu0 0.0
        %544 = vmatprep.mubr.f32.mxu0 0.0
        %545 = vmatmul.mubr.f32.gmra.mxu0 %v361
        %v546 = vpop.f32.mrf.mxu0
        %v547 = vadd.f32 %v472, %v546
        %v548 = vpop.f32.mrf.mxu0
        %549 = vmatprep.mubr.f32.mxu0 0.0
        %550 = vmatmul.mubr.f32.gmra.mxu0 %v362
        %v551 = vpop.f32.mrf.mxu0
        %v552 = vadd.f32 %v477, %v551
        %v553 = vpop.f32.mrf.mxu0
        %554 = vdwg.mxu0
        %v555 = vld [vmem:[%s2] sm:$0x1]
        %v557 = vlaneseq
        %v558 = vshrl.u32 %v557, 7
        %v559 = vsub.s32 0, %v558
        %v560 = vrot.slane %v555, %v559
        %v562 = vadd.f32 %v547, %v560
        %v563 = vadd.f32 %v552, %v560
        %v564 = vmax.f32 %v562, 0.0
        %v565 = vmax.f32 %v563, 0.0
        %s566 = scalar_lea.vmem [#allocation7], 128
        %v567 = vld [vmem:[%s566] sm:$0xff]
        %v568 = vld [vmem:[%s566 + $0x8] sm:$0xff]
        %v569 = vld [vmem:[%s566 + $0x10] sm:$0xff]
        %v570 = vld [vmem:[%s566 + $0x18] sm:$0xff]
        %v571 = vld [vmem:[%s566 + $0x20] sm:$0xff]
        %v572 = vld [vmem:[%s566 + $0x28] sm:$0xff]
        %v573 = vld [vmem:[%s566 + $0x30] sm:$0xff]
        %v574 = vld [vmem:[%s566 + $0x38] sm:$0xff]
        %v575 = vld [vmem:[%s566 + $0x40] sm:$0xff]
        %v576 = vld [vmem:[%s566 + $0x48] sm:$0xff]
        %v577 = vld [vmem:[%s566 + $0x50] sm:$0xff]
        %v578 = vld [vmem:[%s566 + $0x58] sm:$0xff]
        %v579 = vld [vmem:[%s566 + $0x60] sm:$0xff]
        %v580 = vld [vmem:[%s566 + $0x68] sm:$0xff]
        %v581 = vld [vmem:[%s566 + $0x70] sm:$0xff]
        %v582 = vld [vmem:[%s566 + $0x78] sm:$0xff]
        %v585 = vrot.slane %v564, 7
        %v586 = vrot.slane %v565, 7
        %v587 = vsel %vm382, %v585, %v586
        %v590 = vsel %vm382, 0.0, %v585
        %v591 = vld [vmem:[#allocation7] sm:$0xff]
        %v592 = vld [vmem:[#allocation7 + $0x8] sm:$0xff]
        %v593 = vld [vmem:[#allocation7 + $0x10] sm:$0xff]
        %v594 = vld [vmem:[#allocation7 + $0x18] sm:$0xff]
        %v595 = vld [vmem:[#allocation7 + $0x20] sm:$0xff]
        %v596 = vld [vmem:[#allocation7 + $0x28] sm:$0xff]
        %v597 = vld [vmem:[#allocation7 + $0x30] sm:$0xff]
        %v598 = vld [vmem:[#allocation7 + $0x38] sm:$0xff]
        %v599 = vld [vmem:[#allocation7 + $0x40] sm:$0xff]
        %v600 = vld [vmem:[#allocation7 + $0x48] sm:$0xff]
        %v601 = vld [vmem:[#allocation7 + $0x50] sm:$0xff]
        %v602 = vld [vmem:[#allocation7 + $0x58] sm:$0xff]
        %v603 = vld [vmem:[#allocation7 + $0x60] sm:$0xff]
        %v604 = vld [vmem:[#allocation7 + $0x68] sm:$0xff]
        %v605 = vld [vmem:[#allocation7 + $0x70] sm:$0xff]
        %v606 = vld [vmem:[#allocation7 + $0x78] sm:$0xff]
        %607 = vmatprep.subr.mxu0 0.0
        %608 = vmatpush1.msra.mxu0 %v606
        %609 = vmatprep.subr.mxu0 0.0
        %610 = vmatpush1.msra.mxu0 %v605
        %611 = vmatprep.subr.mxu0 0.0
        %612 = vmatpush1.msra.mxu0 %v604
        %613 = vmatprep.subr.mxu0 0.0
        %614 = vmatpush1.msra.mxu0 %v603
        %615 = vmatprep.subr.mxu0 0.0
        %616 = vmatpush1.msra.mxu0 %v602
        %617 = vmatprep.subr.mxu0 0.0
        %618 = vmatpush1.msra.mxu0 %v601
        %619 = vmatprep.subr.mxu0 0.0
        %620 = vmatpush1.msra.mxu0 %v600
        %621 = vmatprep.subr.mxu0 0.0
        %622 = vmatpush1.msra.mxu0 %v599
        %623 = vmatprep.subr.mxu0 0.0
        %624 = vmatpush1.msra.mxu0 %v598
        %625 = vmatprep.subr.mxu0 0.0
        %626 = vmatpush1.msra.mxu0 %v597
        %627 = vmatprep.subr.mxu0 0.0
        %628 = vmatpush1.msra.mxu0 %v596
        %629 = vmatprep.subr.mxu0 0.0
        %630 = vmatpush1.msra.mxu0 %v595
        %631 = vmatprep.subr.mxu0 0.0
        %632 = vmatpush1.msra.mxu0 %v594
        %633 = vmatprep.subr.mxu0 0.0
        %634 = vmatpush1.msra.mxu0 %v593
        %635 = vmatprep.subr.mxu0 0.0
        %636 = vmatpush1.msra.mxu0 %v592
        %637 = vmatprep.subr.mxu0 0.0
        %638 = vmatpush1.msra.mxu0 %v591
        %639 = vmatprep.subr.mxu0 0.0
        %640 = vmatpush2.msra.mxu0 0.0
        %641 = vmatprep.subr.mxu0 0.0
        %642 = vmatpush2.msra.mxu0 0.0
        %643 = vmatprep.subr.mxu0 0.0
        %644 = vmatpush2.msra.mxu0 0.0
        %645 = vmatprep.subr.mxu0 0.0
        %646 = vmatpush2.msra.mxu0 0.0
        %647 = vmatprep.subr.mxu0 0.0
        %648 = vmatpush2.msra.mxu0 0.0
        %649 = vmatprep.subr.mxu0 0.0
        %650 = vmatpush2.msra.mxu0 0.0
        %651 = vmatprep.subr.mxu0 0.0
        %652 = vmatpush2.msra.mxu0 0.0
        %653 = vmatprep.subr.mxu0 0.0
        %654 = vmatpush2.msra.mxu0 0.0
        %655 = vmatprep.subr.mxu0 0.0
        %656 = vmatpush2.msra.mxu0 0.0
        %657 = vmatprep.subr.mxu0 0.0
        %658 = vmatpush2.msra.mxu0 0.0
        %659 = vmatprep.subr.mxu0 0.0
        %660 = vmatpush2.msra.mxu0 0.0
        %661 = vmatprep.subr.mxu0 0.0
        %662 = vmatpush2.msra.mxu0 0.0
        %663 = vmatprep.subr.mxu0 0.0
        %664 = vmatpush2.msra.mxu0 0.0
        %665 = vmatprep.subr.mxu0 0.0
        %666 = vmatpush2.msra.mxu0 0.0
        %667 = vmatprep.subr.mxu0 0.0
        %668 = vmatpush2.msra.mxu0 0.0
        %669 = vmatprep.subr.mxu0 0.0
        %670 = vmatpush2.msra.mxu0 0.0
        %671 = vmatprep.mubr.f32.mxu0 0.0
        %672 = vmatmul.mubr.f32.gmra.mxu0 %v590
        %v673 = vpop.f32.mrf.mxu0
        %v674 = vadd.f32 0.0, %v673
        %v675 = vpop.f32.mrf.mxu0
        %676 = vmatprep.mubr.f32.mxu0 0.0
        %677 = vmatmul.mubr.f32.gmra.mxu0 %v587
        %v678 = vpop.f32.mrf.mxu0
        %v679 = vadd.f32 0.0, %v678
        %v680 = vpop.f32.mrf.mxu0
        %681 = vdwg.mxu0
        %682 = vmatprep.subr.mxu0 0.0
        %683 = vmatpush1.msra.mxu0 %v582
        %684 = vmatprep.subr.mxu0 0.0
        %685 = vmatpush1.msra.mxu0 %v581
        %686 = vmatprep.subr.mxu0 0.0
        %687 = vmatpush1.msra.mxu0 %v580
        %688 = vmatprep.subr.mxu0 0.0
        %689 = vmatpush1.msra.mxu0 %v579
        %690 = vmatprep.subr.mxu0 0.0
        %691 = vmatpush1.msra.mxu0 %v578
        %692 = vmatprep.subr.mxu0 0.0
        %693 = vmatpush1.msra.mxu0 %v577
        %694 = vmatprep.subr.mxu0 0.0
        %695 = vmatpush1.msra.mxu0 %v576
        %696 = vmatprep.subr.mxu0 0.0
        %697 = vmatpush1.msra.mxu0 %v575
        %698 = vmatprep.subr.mxu0 0.0
        %699 = vmatpush1.msra.mxu0 %v574
        %700 = vmatprep.subr.mxu0 0.0
        %701 = vmatpush1.msra.mxu0 %v573
        %702 = vmatprep.subr.mxu0 0.0
        %703 = vmatpush1.msra.mxu0 %v572
        %704 = vmatprep.subr.mxu0 0.0
        %705 = vmatpush1.msra.mxu0 %v571
        %706 = vmatprep.subr.mxu0 0.0
        %707 = vmatpush1.msra.mxu0 %v570
        %708 = vmatprep.subr.mxu0 0.0
        %709 = vmatpush1.msra.mxu0 %v569
        %710 = vmatprep.subr.mxu0 0.0
        %711 = vmatpush1.msra.mxu0 %v568
        %712 = vmatprep.subr.mxu0 0.0
        %713 = vmatpush1.msra.mxu0 %v567
        %714 = vmatprep.subr.mxu0 0.0
        %715 = vmatpush2.msra.mxu0 0.0
        %716 = vmatprep.subr.mxu0 0.0
        %717 = vmatpush2.msra.mxu0 0.0
        %718 = vmatprep.subr.mxu0 0.0
        %719 = vmatpush2.msra.mxu0 0.0
        %720 = vmatprep.subr.mxu0 0.0
        %721 = vmatpush2.msra.mxu0 0.0
        %722 = vmatprep.subr.mxu0 0.0
        %723 = vmatpush2.msra.mxu0 0.0
        %724 = vmatprep.subr.mxu0 0.0
        %725 = vmatpush2.msra.mxu0 0.0
        %726 = vmatprep.subr.mxu0 0.0
        %727 = vmatpush2.msra.mxu0 0.0
        %728 = vmatprep.subr.mxu0 0.0
        %729 = vmatpush2.msra.mxu0 0.0
        %730 = vmatprep.subr.mxu0 0.0
        %731 = vmatpush2.msra.mxu0 0.0
        %732 = vmatprep.subr.mxu0 0.0
        %733 = vmatpush2.msra.mxu0 0.0
        %734 = vmatprep.subr.mxu0 0.0
        %735 = vmatpush2.msra.mxu0 0.0
        %736 = vmatprep.subr.mxu0 0.0
        %737 = vmatpush2.msra.mxu0 0.0
        %738 = vmatprep.subr.mxu0 0.0
        %739 = vmatpush2.msra.mxu0 0.0
        %740 = vmatprep.subr.mxu0 0.0
        %741 = vmatpush2.msra.mxu0 0.0
        %742 = vmatprep.subr.mxu0 0.0
        %743 = vmatpush2.msra.mxu0 0.0
        %744 = vmatprep.subr.mxu0 0.0
        %745 = vmatpush2.msra.mxu0 0.0
        %746 = vmatprep.mubr.f32.mxu0 0.0
        %747 = vmatmul.mubr.f32.gmra.mxu0 %v564
        %v748 = vpop.f32.mrf.mxu0
        %v749 = vadd.f32 %v674, %v748
        %v750 = vpop.f32.mrf.mxu0
        %751 = vmatprep.mubr.f32.mxu0 0.0
        %752 = vmatmul.mubr.f32.gmra.mxu0 %v565
        %v753 = vpop.f32.mrf.mxu0
        %v754 = vadd.f32 %v679, %v753
        %v755 = vpop.f32.mrf.mxu0
        %756 = vdwg.mxu0
        %v757 = vld [vmem:[%s4] sm:$0x1]
        %v759 = vlaneseq
        %v760 = vshrl.u32 %v759, 7
        %v761 = vsub.s32 0, %v760
        %v762 = vrot.slane %v757, %v761
        %v764 = vadd.f32 %v749, %v762
        %v765 = vadd.f32 %v754, %v762
        %v766 = vmax.f32 %v764, 0.0
        %v767 = vmax.f32 %v765, 0.0
        %v768 = vld [vmem:[#allocation8] sm:$0xff]
        %v769 = vld [vmem:[#allocation8 + $0x8] sm:$0xff]
        %v770 = vld [vmem:[#allocation8 + $0x10] sm:$0xff]
        %v771 = vld [vmem:[#allocation8 + $0x18] sm:$0xff]
        %v772 = vld [vmem:[#allocation8 + $0x20] sm:$0xff]
        %v773 = vld [vmem:[#allocation8 + $0x28] sm:$0xff]
        %v774 = vld [vmem:[#allocation8 + $0x30] sm:$0xff]
        %v775 = vld [vmem:[#allocation8 + $0x38] sm:$0xff]
        %v776 = vld [vmem:[#allocation8 + $0x40] sm:$0xff]
        %v777 = vld [vmem:[#allocation8 + $0x48] sm:$0xff]
        %v778 = vld [vmem:[#allocation8 + $0x50] sm:$0xff]
        %v779 = vld [vmem:[#allocation8 + $0x58] sm:$0xff]
        %v780 = vld [vmem:[#allocation8 + $0x60] sm:$0xff]
        %v781 = vld [vmem:[#allocation8 + $0x68] sm:$0xff]
        %v782 = vld [vmem:[#allocation8 + $0x70] sm:$0xff]
        %v783 = vld [vmem:[#allocation8 + $0x78] sm:$0xff]
        %v784 = vld [vmem:[%s6] sm:$0x1]
        %v786 = vlaneseq
        %v787 = vshrl.u32 %v786, 7
        %v788 = vsub.s32 0, %v787
        %v789 = vrot.slane %v784, %v788
        %791 = vmatprep.subr.mxu0 0.0
        %792 = vmatpush1.msra.mxu0 %v783
        %793 = vmatprep.subr.mxu0 0.0
        %794 = vmatpush1.msra.mxu0 %v782
        %795 = vmatprep.subr.mxu0 0.0
        %796 = vmatpush1.msra.mxu0 %v781
        %797 = vmatprep.subr.mxu0 0.0
        %798 = vmatpush1.msra.mxu0 %v780
        %799 = vmatprep.subr.mxu0 0.0
        %800 = vmatpush1.msra.mxu0 %v779
        %801 = vmatprep.subr.mxu0 0.0
        %802 = vmatpush1.msra.mxu0 %v778
        %803 = vmatprep.subr.mxu0 0.0
        %804 = vmatpush1.msra.mxu0 %v777
        %805 = vmatprep.subr.mxu0 0.0
        %806 = vmatpush1.msra.mxu0 %v776
        %807 = vmatprep.subr.mxu0 0.0
        %808 = vmatpush1.msra.mxu0 %v775
        %809 = vmatprep.subr.mxu0 0.0
        %810 = vmatpush1.msra.mxu0 %v774
        %811 = vmatprep.subr.mxu0 0.0
        %812 = vmatpush1.msra.mxu0 %v773
        %813 = vmatprep.subr.mxu0 0.0
        %814 = vmatpush1.msra.mxu0 %v772
        %815 = vmatprep.subr.mxu0 0.0
        %816 = vmatpush1.msra.mxu0 %v771
        %817 = vmatprep.subr.mxu0 0.0
        %818 = vmatpush1.msra.mxu0 %v770
        %819 = vmatprep.subr.mxu0 0.0
        %820 = vmatpush1.msra.mxu0 %v769
        %821 = vmatprep.subr.mxu0 0.0
        %822 = vmatpush1.msra.mxu0 %v768
        %823 = vmatprep.subr.mxu0 0.0
        %824 = vmatpush2.msra.mxu0 0.0
        %825 = vmatprep.subr.mxu0 0.0
        %826 = vmatpush2.msra.mxu0 0.0
        %827 = vmatprep.subr.mxu0 0.0
        %828 = vmatpush2.msra.mxu0 0.0
        %829 = vmatprep.subr.mxu0 0.0
        %830 = vmatpush2.msra.mxu0 0.0
        %831 = vmatprep.subr.mxu0 0.0
        %832 = vmatpush2.msra.mxu0 0.0
        %833 = vmatprep.subr.mxu0 0.0
        %834 = vmatpush2.msra.mxu0 0.0
        %835 = vmatprep.subr.mxu0 0.0
        %836 = vmatpush2.msra.mxu0 0.0
        %837 = vmatprep.subr.mxu0 0.0
        %838 = vmatpush2.msra.mxu0 0.0
        %839 = vmatprep.subr.mxu0 0.0
        %840 = vmatpush2.msra.mxu0 0.0
        %841 = vmatprep.subr.mxu0 0.0
        %842 = vmatpush2.msra.mxu0 0.0
        %843 = vmatprep.subr.mxu0 0.0
        %844 = vmatpush2.msra.mxu0 0.0
        %845 = vmatprep.subr.mxu0 0.0
        %846 = vmatpush2.msra.mxu0 0.0
        %847 = vmatprep.subr.mxu0 0.0
        %848 = vmatpush2.msra.mxu0 0.0
        %849 = vmatprep.subr.mxu0 0.0
        %850 = vmatpush2.msra.mxu0 0.0
        %851 = vmatprep.subr.mxu0 0.0
        %852 = vmatpush2.msra.mxu0 0.0
        %853 = vmatprep.subr.mxu0 0.0
        %854 = vmatpush2.msra.mxu0 0.0
        %855 = vmatprep.mubr.f32.mxu0 0.0
        %856 = vmatmul.mubr.f32.gmra.mxu0 %v361
        %v857 = vpop.f32.mrf.mxu0
        %v858 = vadd.f32 %v789, %v857
        %v859 = vpop.f32.mrf.mxu0
        %860 = vmatprep.mubr.f32.mxu0 0.0
        %861 = vmatmul.mubr.f32.gmra.mxu0 %v362
        %v862 = vpop.f32.mrf.mxu0
        %v863 = vadd.f32 %v789, %v862
        %v864 = vpop.f32.mrf.mxu0
        %865 = vdwg.mxu0
        %v866 = vadd.f32 %v766, %v858
        %v867 = vadd.f32 %v767, %v863
        %v868 = vmax.f32 %v866, 0.0
        %v869 = vmax.f32 %v867, 0.0
        %870 = vst [vmem:[%s358] sm:$0xff] %v868
        %871 = vst [vmem:[%s358 + $0x8] sm:$0xff] %v869
        %s872 = sand.u32 %s202, 1
        %s873 = scalar_lea.sflag [#allocation4], %s872
        %s874 = sand.u32 %s202, 1
        %s875 = smul.addr %s874, 16
        %s876 = scalar_lea.vmem [#allocation10], %s875
        // Predicated region
        $region65: #{tpu_custom_call.1} parent=47 // pred_check
          %p877 = pneg %p212
        $region66: #{tpu_custom_call.1} parent=47 // pred_check_branch
          %879 = sbr.rel (%p877) target = $region68
        $region67: #{tpu_custom_call.1} parent=47 // pred_region
          %s880 = smul.u32 2, %s31
          %s882 = ssub.s32 256, 256
          %883 = vsyncadd %s873, %s882
          %s884 = smul.addr %s30, 2
          %s885 = sadd.s32 %s880, %s884
          %s886 = smul.addr %s885, 128
          %s887 = scalar_lea.hbm %s7, %s886
          %s888 = sshll.u32 %s876, 4
          %s889 = int_to_ptr.vmem [resolvable:$true] %s888
          %894 = dma.vmem_to_hbm [thread:$0]  %s889, 256, %s887, %s873, 128, 128, 8
        $region68: #{tpu_custom_call.1} parent=47 // pred_fallthru
          _
      $region48: #{tpu_custom_call.1} parent=5 // pred_fallthru
        _
      %p895 = scmp.le.s32.totalorder 2, %s21
      // Predicated region
      $region69: #{tpu_custom_call.1} parent=5 // pred_check
        %p896 = pneg %p895
      $region70: #{tpu_custom_call.1} parent=5 // pred_check_branch
        %898 = sbr.rel (%p896) target = $region72
      $region71: #{tpu_custom_call.1} parent=5 // pred_region
        %s899 = ssub.s32 %s21, 2
        // Predicated region
        $region73: #{tpu_custom_call.1} parent=71 // pred_check
          %p900 = pneg %p218
        $region74: #{tpu_custom_call.1} parent=71 // pred_check_branch
          %902 = sbr.rel (%p900) target = $region76
        $region75: #{tpu_custom_call.1} parent=71 // pred_region
          %s903 = sand.u32 %s203, 1
          %s904 = scalar_lea.sflag [#allocation4], %s903
          %s905 = sand.u32 %s203, 1
          %s906 = smul.addr %s905, 16
          %s907 = scalar_lea.vmem [#allocation10], %s906
          %908 = dma.done %s904, 256
        $region76: #{tpu_custom_call.1} parent=71 // pred_fallthru
          _
      $region72: #{tpu_custom_call.1} parent=5 // pred_fallthru
        _
    $region6: #{tpu_custom_call.1} parent=1 // loop_footer
      %s25 = sadd.s32 1, %s21
    $region7: #{tpu_custom_call.1} parent=1 // loop_footer_branch
      %20 = sbr.rel target = $region3
    $region8: #{tpu_custom_call.1} parent=1 // loop_exit
      _
    %909 = vsyncpa [#allocation3], 1
    %s910 = scalar_lea.sflag [#allocation3], 1
    %911 = vsyncpa %s910, 1
    %912 = vsyncpa [#allocation6], 1
    %913 = vsyncpa [#allocation9], 1
    %914 = vsyncpa [#allocation4], 1
    %s915 = scalar_lea.sflag [#allocation4], 1
    %916 = vsyncpa %s915, 1

</llo_original>
